<compile_context>
chip_gen: v7x
topology: tpu7x:2x2x1
jax: 0.10.0
libtpu: 0.0.40
codegen_flags: <defaults>
</compile_context>

<pallas_src>
import jax
import jax.numpy as jnp
from jax import lax
from jax.experimental import pallas as pl
from jax.experimental.pallas import tpu as pltpu

EPS = 1e-5  # nn.LayerNorm default eps


# --------------------------------------------------------------------------------------
# Kernels
# --------------------------------------------------------------------------------------
def _ln_and_mix(new_res, gamma_ref, beta_ref, w_ref, b_ref, out_h_ref, out_res_ref):
    """Shared tail: LayerNorm(new_res) -> Linear -> write outputs.  new_res is (TL, D) f32."""
    # One-pass LayerNorm statistics: reduce E[x] and E[x^2] together, var = E[x^2] - mean^2
    # (biased variance, matches torch.nn.LayerNorm).  Clamp var >= 0 against rounding.
    mean = jnp.mean(new_res, axis=-1, keepdims=True)
    mean_sq = jnp.mean(new_res * new_res, axis=-1, keepdims=True)
    var = jnp.maximum(mean_sq - mean * mean, 0.0)
    x = (new_res - mean) * lax.rsqrt(var + EPS)
    x = x * gamma_ref[...].astype(jnp.float32) + beta_ref[...].astype(jnp.float32)

    # Mixer: Linear(dim, dim).  W was pre-transposed to (D_in, D_out) in the wrapper, so
    # this is a plain MXU contraction (no in-loop XLU transpose).  Matmul runs in the
    # weight dtype (bf16 weights -> bf16 MXU path) with f32 accumulation.
    w = w_ref[...]                                          # (D_in, D_out)
    y = jnp.dot(x.astype(w.dtype), w, preferred_element_type=jnp.float32)
    y = y + b_ref[...].astype(jnp.float32)

    out_h_ref[...] = y.astype(out_h_ref.dtype)
    out_res_ref[...] = new_res.astype(out_res_ref.dtype)    # residual_in_fp32 -> float32


def _vim_kernel_with_res(h_ref, res_ref, gamma_ref, beta_ref, w_ref, b_ref,
                         out_h_ref, out_res_ref):
    # Tiles are (TL, D); batch dim squeezed out by the BlockSpec.
    new_res = res_ref[...].astype(jnp.float32) + h_ref[...].astype(jnp.float32)
    _ln_and_mix(new_res, gamma_ref, beta_ref, w_ref, b_ref, out_h_ref, out_res_ref)


def _vim_kernel_no_res(h_ref, gamma_ref, beta_ref, w_ref, b_ref,
                       out_h_ref, out_res_ref):
    # residual is None -> residual := hidden_states (no zeros array read from HBM).
    new_res = h_ref[...].astype(jnp.float32)
    _ln_and_mix(new_res, gamma_ref, beta_ref, w_ref, b_ref, out_h_ref, out_res_ref)


# --------------------------------------------------------------------------------------
# VMEM-aware tile planning
# --------------------------------------------------------------------------------------
def _vmem_capacity_bytes():
    try:
        return int(pltpu.get_tpu_info().vmem_capacity_bytes)
    except Exception:
        return 64 * 1024 * 1024  # conservative fallback (v7x per-TensorCore VMEM)


def _plan_tiles(B, L_pad, D, h_bytes, r_bytes, w_bytes, has_residual, step):
    """Pick the sequence tile TL and an explicit vmem_limit_bytes from the working set."""
    cap = _vmem_capacity_bytes()
    # ~60% of physical VMEM as the pipelined working-set budget (keeps the
    # double-buffered set <= ~40 MiB on v7x, well inside v5e/v6e's 128 MiB).
    budget = int(cap * 0.6)

    # Resident (single-buffered) parameter blocks + margin for compiler-internal scratch.
    fixed = D * D * w_bytes + 3 * D * 4 + (1 << 20)

    # Per sequence-row VMEM cost of the double-buffered activation blocks plus headroom
    # for the f32 in-kernel temporaries.
    per_row = 2 * D * h_bytes                     # hidden_states input
    if has_residual:
        per_row += 2 * D * r_bytes                # residual input
    per_row += 2 * D * h_bytes                    # mixer output
    per_row += 2 * D * 4                          # fp32 residual output
    per_row += 2 * D * 4                          # f32 temporaries headroom

    max_tl = 1024
    cands = sorted(
        (t for t in range(step, min(L_pad, max_tl) + 1, step) if L_pad % t == 0),
        reverse=True)
    fitting = [t for t in cands if fixed + t * per_row <= budget] or [cands[-1]]
    tl = fitting[0]
    if B == 1:
        # Keep >=2 parallel grid steps so both v7x TensorCores get work.
        for t in fitting:
            if L_pad // t >= 2:
                tl = t
                break

    working_set = fixed + tl * per_row
    vmem_limit = int(min(cap * 0.85, max(working_set * 1.5, 32 * 1024 * 1024)))
    return tl, vmem_limit


# --------------------------------------------------------------------------------------
# Wrapper
# --------------------------------------------------------------------------------------
def vim_block(hidden_states, residual, gamma, beta, mixer_w, mixer_b):
    """hidden_states: (B, L, D); residual: (B, L, D) or None.

    Returns (mixer_output (B, L, D) in hidden_states dtype, residual (B, L, D) in fp32).
    """
    B, L, D = hidden_states.shape
    h_bytes = hidden_states.dtype.itemsize
    r_bytes = residual.dtype.itemsize if residual is not None else h_bytes
    w_bytes = mixer_w.dtype.itemsize

    # bf16 packs 16 rows per sublane group -> use 16-row tile granularity for <32-bit acts.
    step = 8 if h_bytes >= 4 else 16

    # Pad the sequence dim so every tile is sublane-aligned (masked tail handled by padding
    # with zeros and slicing the outputs back).
    L_pad = ((L + step - 1) // step) * step
    if L_pad != L:
        pad = ((0, 0), (0, L_pad - L), (0, 0))
        hidden_states = jnp.pad(hidden_states, pad)
        if residual is not None:
            residual = jnp.pad(residual, pad)

    TL, vmem_limit = _plan_tiles(B, L_pad, D, h_bytes, r_bytes, w_bytes,
                                 residual is not None, step)
    n_l = L_pad // TL

    gamma2 = gamma.reshape(1, D)
    beta2 = beta.reshape(1, D)
    b2 = mixer_b.reshape(1, D)
    # One-time transpose (amortized over all B * n_l grid steps; constant-folded under jit
    # for fixed weights) so the kernel contraction needs no in-loop RHS transpose.
    w_t = mixer_w.T                                # (D_in, D_out)

    # Activation tiles: (TL, D) in-kernel (leading batch dim squeezed).
    act_spec = pl.BlockSpec((None, TL, D), lambda b, l: (b, l, 0))
    # Small parameters: constant index_map (no re-DMA per step) + single buffer (half VMEM).
    vec_spec = pl.BlockSpec((1, D), lambda b, l: (0, 0), pipeline_mode=pl.Buffered(1))
    w_spec = pl.BlockSpec((D, D), lambda b, l: (0, 0), pipeline_mode=pl.Buffered(1))

    out_shapes = (
        jax.ShapeDtypeStruct((B, L_pad, D), hidden_states.dtype),  # mixer output
        jax.ShapeDtypeStruct((B, L_pad, D), jnp.float32),          # residual (fp32)
    )
    out_specs = [act_spec, act_spec]

    compiler_params = pltpu.CompilerParams(
        dimension_semantics=("parallel", "parallel"),
        vmem_limit_bytes=vmem_limit,
    )

    if residual is None:
        kernel = _vim_kernel_no_res
        in_specs = [act_spec, vec_spec, vec_spec, w_spec, vec_spec]
        args = (hidden_states, gamma2, beta2, w_t, b2)
    else:
        kernel = _vim_kernel_with_res
        in_specs = [act_spec, act_spec, vec_spec, vec_spec, w_spec, vec_spec]
        args = (hidden_states, residual, gamma2, beta2, w_t, b2)

    grid_spec = pltpu.PrefetchScalarGridSpec(
        num_scalar_prefetch=0,
        grid=(B, n_l),
        in_specs=in_specs,
        out_specs=out_specs,
    )

    out_h, out_res = pl.pallas_call(
        kernel,
        out_shape=out_shapes,
        grid_spec=grid_spec,
        compiler_params=compiler_params,
    )(*args)

    if L_pad != L:
        out_h = out_h[:, :L]
        out_res = out_res[:, :L]
    return out_h, out_res


# --------------------------------------------------------------------------------------
# Pure-JAX reference (for sanity checking)
# --------------------------------------------------------------------------------------
def vim_block_ref(hidden_states, residual, gamma, beta, mixer_w, mixer_b):
    if residual is None:
        residual = hidden_states.astype(jnp.float32)
    else:
        residual = residual.astype(jnp.float32) + hidden_states.astype(jnp.float32)
    x = residual
    mean = jnp.mean(x, axis=-1, keepdims=True)
    var = jnp.mean(jnp.square(x - mean), axis=-1, keepdims=True)
    normed = (x - mean) / jnp.sqrt(var + EPS) * gamma + beta
    mixed = jnp.dot(normed.astype(mixer_w.dtype), mixer_w.T,
                    preferred_element_type=jnp.float32) + mixer_b
    return mixed.astype(hidden_states.dtype), residual


# --------------------------------------------------------------------------------------
# Self-test
# --------------------------------------------------------------------------------------
if __name__ == "__main__":
    B, L, D = 2, 64, 128   # D multiple of 128 -> lane-dense stores; L exercises tiling.

    key = jax.random.PRNGKey(0)
    k_h, k_r, k_w, k_b = jax.random.split(key, 4)

    hidden_states = jax.random.normal(k_h, (B, L, D), dtype=jnp.float32)
    residual = jax.random.normal(k_r, (B, L, D), dtype=jnp.float32)

    # LayerNorm params (PyTorch default init: weight=1, bias=0).
    gamma = jnp.ones((D,), dtype=jnp.float32)
    beta = jnp.zeros((D,), dtype=jnp.float32)

    # Mixer = Linear(dim, dim), deterministic init, PyTorch (out, in) layout.
    mixer_w = jax.random.normal(k_w, (D, D), dtype=jnp.float32) * 0.05
    mixer_b = jax.random.normal(k_b, (D,), dtype=jnp.float32) * 0.05

    # Case 1: residual provided (f32 activations).
    out_h, out_res = vim_block(hidden_states, residual, gamma, beta, mixer_w, mixer_b)
    jax.block_until_ready((out_h, out_res))
    ref_h, ref_res = vim_block_ref(hidden_states, residual, gamma, beta, mixer_w, mixer_b)
    assert jnp.allclose(out_h, ref_h, atol=5e-3, rtol=5e-3), "case1 hidden mismatch"
    assert jnp.allclose(out_res, ref_res, atol=1e-5, rtol=1e-5), "case1 residual mismatch"

    # Case 2: residual is None (first block in the stack).
    out_h2, out_res2 = vim_block(hidden_states, None, gamma, beta, mixer_w, mixer_b)
    jax.block_until_ready((out_h2, out_res2))
    ref_h2, ref_res2 = vim_block_ref(hidden_states, None, gamma, beta, mixer_w, mixer_b)
    assert jnp.allclose(out_h2, ref_h2, atol=5e-3, rtol=5e-3), "case2 hidden mismatch"
    assert jnp.allclose(out_res2, ref_res2, atol=1e-5, rtol=1e-5), "case2 residual mismatch"

    # Case 3: bf16 activations, L not a multiple of the sublane step (exercises padding,
    # the 16-row bf16 tile granularity, and mixed-dtype output stores).
    L3 = 50
    h3 = jax.random.normal(k_h, (B, L3, D), dtype=jnp.float32).astype(jnp.bfloat16)
    r3 = jax.random.normal(k_r, (B, L3, D), dtype=jnp.float32).astype(jnp.bfloat16)
    out_h3, out_res3 = vim_block(h3, r3, gamma, beta, mixer_w, mixer_b)
    jax.block_until_ready((out_h3, out_res3))
    ref_h3, ref_res3 = vim_block_ref(h3, r3, gamma, beta, mixer_w, mixer_b)
    assert jnp.allclose(out_h3.astype(jnp.float32), ref_h3.astype(jnp.float32),
                        atol=3e-2, rtol=3e-2), "case3 hidden mismatch"
    assert jnp.allclose(out_res3, ref_res3, atol=1e-5, rtol=1e-5), "case3 residual mismatch"

    print("KERNEL_OK")
</pallas_src>

<mosaic_0001>
module attributes {stable_mosaic.version = 11 : i64} {
  func.func @_vim_kernel_with_res(%arg0: i32, %arg1: i32, %arg2: memref<1x64x128xf32, #tpu.memory_space<vmem>>, %arg3: memref<1x64x128xf32, #tpu.memory_space<vmem>>, %arg4: memref<1x128xf32, #tpu.memory_space<vmem>>, %arg5: memref<1x128xf32, #tpu.memory_space<vmem>>, %arg6: memref<128x128xf32, #tpu.memory_space<vmem>>, %arg7: memref<1x128xf32, #tpu.memory_space<vmem>>, %arg8: memref<1x64x128xf32, #tpu.memory_space<vmem>>, %arg9: memref<1x64x128xf32, #tpu.memory_space<vmem>>) attributes {dimension_semantics = [#tpu.dimension_semantics<parallel>, #tpu.dimension_semantics<parallel>], iteration_bounds = array<i64: 2, 1>, scalar_prefetch = 0 : i64, scratch_operands = 0 : i64, tpu.core_type = #tpu.core_type<tc>, window_params = [{transform_indices = @transform_0, window_bounds = array<i64: 1, 64, 128>}, {transform_indices = @transform_1, window_bounds = array<i64: 1, 64, 128>}, {pipeline_mode = #tpu.pipeline_mode<synchronous>, transform_indices = @transform_2, window_bounds = array<i64: 1, 128>}, {pipeline_mode = #tpu.pipeline_mode<synchronous>, transform_indices = @transform_3, window_bounds = array<i64: 1, 128>}, {pipeline_mode = #tpu.pipeline_mode<synchronous>, transform_indices = @transform_4, window_bounds = array<i64: 128, 128>}, {pipeline_mode = #tpu.pipeline_mode<synchronous>, transform_indices = @transform_5, window_bounds = array<i64: 1, 128>}, {transform_indices = @transform_6, window_bounds = array<i64: 1, 64, 128>}, {transform_indices = @transform_7, window_bounds = array<i64: 1, 64, 128>}]} {
    %c0 = arith.constant 0 : index
    %c0_0 = arith.constant 0 : index
    %c0_1 = arith.constant 0 : index
    %0 = vector.load %arg3[%c0, %c0_0, %c0_1] : memref<1x64x128xf32, #tpu.memory_space<vmem>>, vector<1x64x128xf32>
    %1 = vector.shape_cast %0 : vector<1x64x128xf32> to vector<64x128xf32>
    %c0_2 = arith.constant 0 : index
    %c0_3 = arith.constant 0 : index
    %c0_4 = arith.constant 0 : index
    %2 = vector.load %arg2[%c0_2, %c0_3, %c0_4] : memref<1x64x128xf32, #tpu.memory_space<vmem>>, vector<1x64x128xf32>
    %3 = vector.shape_cast %2 : vector<1x64x128xf32> to vector<64x128xf32>
    %4 = arith.addf %1, %3 : vector<64x128xf32>
    %cst = arith.constant dense<0.000000e+00> : vector<64xf32>
    %5 = vector.multi_reduction <add>, %4, %cst [1] : vector<64x128xf32> to vector<64xf32>
    %6 = vector.shape_cast %5 : vector<64xf32> to vector<64x1xf32>
    %cst_5 = arith.constant 1.280000e+02 : f32
    %7 = vector.broadcast %cst_5 : f32 to vector<64x1xf32>
    %8 = arith.divf %6, %7 : vector<64x1xf32>
    %9 = arith.mulf %4, %4 : vector<64x128xf32>
    %cst_6 = arith.constant dense<0.000000e+00> : vector<64xf32>
    %10 = vector.multi_reduction <add>, %9, %cst_6 [1] : vector<64x128xf32> to vector<64xf32>
    %11 = vector.shape_cast %10 : vector<64xf32> to vector<64x1xf32>
    %cst_7 = arith.constant 1.280000e+02 : f32
    %12 = vector.broadcast %cst_7 : f32 to vector<64x1xf32>
    %13 = arith.divf %11, %12 : vector<64x1xf32>
    %14 = arith.mulf %8, %8 : vector<64x1xf32>
    %15 = arith.subf %13, %14 : vector<64x1xf32>
    %cst_8 = arith.constant 0.000000e+00 : f32
    %16 = vector.broadcast %cst_8 : f32 to vector<64x1xf32>
    %17 = arith.maximumf %15, %16 : vector<64x1xf32>
    %18 = vector.broadcast %8 : vector<64x1xf32> to vector<64x128xf32>
    %19 = arith.subf %4, %18 : vector<64x128xf32>
    %cst_9 = arith.constant 9.99999974E-6 : f32
    %20 = vector.broadcast %cst_9 : f32 to vector<64x1xf32>
    %21 = arith.addf %17, %20 : vector<64x1xf32>
    %22 = math.rsqrt %21 : vector<64x1xf32>
    %23 = vector.broadcast %22 : vector<64x1xf32> to vector<64x128xf32>
    %24 = arith.mulf %19, %23 : vector<64x128xf32>
    %c0_10 = arith.constant 0 : index
    %c0_11 = arith.constant 0 : index
    %25 = vector.load %arg4[%c0_10, %c0_11] : memref<1x128xf32, #tpu.memory_space<vmem>>, vector<1x128xf32>
    %26 = vector.broadcast %25 : vector<1x128xf32> to vector<64x128xf32>
    %27 = arith.mulf %24, %26 : vector<64x128xf32>
    %c0_12 = arith.constant 0 : index
    %c0_13 = arith.constant 0 : index
    %28 = vector.load %arg5[%c0_12, %c0_13] : memref<1x128xf32, #tpu.memory_space<vmem>>, vector<1x128xf32>
    %29 = vector.broadcast %28 : vector<1x128xf32> to vector<64x128xf32>
    %30 = arith.addf %27, %29 : vector<64x128xf32>
    %c0_14 = arith.constant 0 : index
    %c0_15 = arith.constant 0 : index
    %31 = vector.load %arg6[%c0_14, %c0_15] : memref<128x128xf32, #tpu.memory_space<vmem>>, vector<128x128xf32>
    %cst_16 = arith.constant dense<0.000000e+00> : vector<64x128xf32>
    %32 = tpu.matmul %30, %31, %cst_16 {dimension_numbers = #tpu.dot_dimension_numbers<[1], [0], [0], [1], [0, 0, 1, 1], [], []>} : vector<64x128xf32>, vector<128x128xf32>, vector<64x128xf32> -> vector<64x128xf32>
    %c0_17 = arith.constant 0 : index
    %c0_18 = arith.constant 0 : index
    %33 = vector.load %arg7[%c0_17, %c0_18] : memref<1x128xf32, #tpu.memory_space<vmem>>, vector<1x128xf32>
    %34 = vector.broadcast %33 : vector<1x128xf32> to vector<64x128xf32>
    %35 = arith.addf %32, %34 : vector<64x128xf32>
    %c0_19 = arith.constant 0 : index
    %c0_20 = arith.constant 0 : index
    %c0_21 = arith.constant 0 : index
    %36 = vector.load %arg8[%c0_19, %c0_20, %c0_21] : memref<1x64x128xf32, #tpu.memory_space<vmem>>, vector<1x64x128xf32>
    %37 = vector.shape_cast %36 : vector<1x64x128xf32> to vector<64x128xf32>
    %38 = vector.shape_cast %35 : vector<64x128xf32> to vector<1x64x128xf32>
    tpu.vector_store %arg8[%c0_19, %c0_20, %c0_21], %38 {strides = array<i32>} : memref<1x64x128xf32, #tpu.memory_space<vmem>>, vector<1x64x128xf32>,
    %c0_22 = arith.constant 0 : index
    %c0_23 = arith.constant 0 : index
    %c0_24 = arith.constant 0 : index
    %39 = vector.load %arg9[%c0_22, %c0_23, %c0_24] : memref<1x64x128xf32, #tpu.memory_space<vmem>>, vector<1x64x128xf32>
    %40 = vector.shape_cast %39 : vector<1x64x128xf32> to vector<64x128xf32>
    %41 = vector.shape_cast %4 : vector<64x128xf32> to vector<1x64x128xf32>
    tpu.vector_store %arg9[%c0_22, %c0_23, %c0_24], %41 {strides = array<i32>} : memref<1x64x128xf32, #tpu.memory_space<vmem>>, vector<1x64x128xf32>,
    return
  }
  func.func @transform_0(%arg0: i32, %arg1: i32) -> (i32, i32, i32) {
    %c0_i32 = arith.constant 0 : i32
    %c0_i32_0 = arith.constant 0 : i32
    return %arg0, %arg1, %c0_i32 : i32, i32, i32
  }
  func.func @transform_1(%arg0: i32, %arg1: i32) -> (i32, i32, i32) {
    %c0_i32 = arith.constant 0 : i32
    %c0_i32_0 = arith.constant 0 : i32
    return %arg0, %arg1, %c0_i32 : i32, i32, i32
  }
  func.func @transform_2(%arg0: i32, %arg1: i32) -> (i32, i32) {
    %c0_i32 = arith.constant 0 : i32
    %c0_i32_0 = arith.constant 0 : i32
    %c0_i32_1 = arith.constant 0 : i32
    return %c0_i32, %c0_i32_0 : i32, i32
  }
  func.func @transform_3(%arg0: i32, %arg1: i32) -> (i32, i32) {
    %c0_i32 = arith.constant 0 : i32
    %c0_i32_0 = arith.constant 0 : i32
    %c0_i32_1 = arith.constant 0 : i32
    return %c0_i32, %c0_i32_0 : i32, i32
  }
  func.func @transform_4(%arg0: i32, %arg1: i32) -> (i32, i32) {
    %c0_i32 = arith.constant 0 : i32
    %c0_i32_0 = arith.constant 0 : i32
    %c0_i32_1 = arith.constant 0 : i32
    return %c0_i32, %c0_i32_0 : i32, i32
  }
  func.func @transform_5(%arg0: i32, %arg1: i32) -> (i32, i32) {
    %c0_i32 = arith.constant 0 : i32
    %c0_i32_0 = arith.constant 0 : i32
    %c0_i32_1 = arith.constant 0 : i32
    return %c0_i32, %c0_i32_0 : i32, i32
  }
  func.func @transform_6(%arg0: i32, %arg1: i32) -> (i32, i32, i32) {
    %c0_i32 = arith.constant 0 : i32
    %c0_i32_0 = arith.constant 0 : i32
    return %arg0, %arg1, %c0_i32 : i32, i32, i32
  }
  func.func @transform_7(%arg0: i32, %arg1: i32) -> (i32, i32, i32) {
    %c0_i32 = arith.constant 0 : i32
    %c0_i32_0 = arith.constant 0 : i32
    return %arg0, %arg1, %c0_i32 : i32, i32, i32
  }
}

</mosaic_0001>

<llo_original>
// kernel: tpu_custom_call.1
$region0: #{tpu_custom_call.1}
  #allocation0 [shape = 'u32[]', space=smem, size = 0x4, offset = 0x4, fixed_abs, tag = 'smem constant byte address 0x4 - core index']
  #allocation1 [shape = 'u32[144,128]{1,0:T(1,128)}', space=vmem, size = 0x12000, scoped, tag = 'internal scratch']
  %s0 = inlined_call_operand.hbm [shape: f32[2,64,128], index: 0, kind: input, shape index: {}]
  %s1 = inlined_call_operand.hbm [shape: f32[2,64,128], index: 1, kind: input, shape index: {}]
  %s2 = inlined_call_operand.vmem [shape: f32[1,128], index: 2, kind: input, shape index: {}]
  %s3 = inlined_call_operand.vmem [shape: f32[1,128], index: 3, kind: input, shape index: {}]
  %s4 = inlined_call_operand.hbm [shape: f32[128,128], index: 4, kind: input, shape index: {}]
  %s5 = inlined_call_operand.vmem [shape: f32[1,128], index: 5, kind: input, shape index: {}]
  %s6 = inlined_call_operand.hbm [shape: f32[2,64,128], index: 6, kind: output, shape index: {0}]
  %s7 = inlined_call_operand.hbm [shape: f32[2,64,128], index: 7, kind: output, shape index: {1}]
  %8 = xla_tuple %s6, %s7
  %s9 = sld [smem:[#allocation0]]
  $region77: #{tpu_custom_call.1} parent=0
    _
  %s11 = ssub.s32 1, %s9
  %s12 = scalar_select 0, %s11, %s9
  $region1: #{tpu_custom_call.1} parent=0
    #allocation2 [shape = 'u8[65536]{0}', space=vmem, size = 0x10000, scoped, tag = 'input window, operand 0']
    #allocation3 [shape = 's32[2]{0}', space=sflag, size = 0x8, scoped, tag = 'scoped memory for tpu_custom_call.1']
    #allocation4 [shape = 's32[2]{0}', space=sflag, size = 0x8, scoped, tag = 'scoped memory for tpu_custom_call.1']
    #allocation5 [shape = 'u8[65536]{0}', space=vmem, size = 0x10000, scoped, tag = 'input window, operand 1']
    #allocation6 [shape = 's32[2]{0}', space=sflag, size = 0x8, scoped, tag = 'scoped memory for tpu_custom_call.1']
    #allocation7 [shape = 'u8[65536]{0}', space=vmem, size = 0x10000, scoped, tag = 'input window, operand 4, single buffered']
    #allocation8 [shape = 'u8[65536]{0}', space=vmem, size = 0x10000, scoped, tag = 'output window, operand 0']
    #allocation9 [shape = 'u8[65536]{0}', space=vmem, size = 0x10000, scoped, tag = 'output window, operand 1']
    #allocation10 [shape = 's32[2]{0}', space=sflag, size = 0x8, scoped, tag = 'scoped memory for tpu_custom_call.1']
    %13 = vsyncpa [#allocation3], 0
    %s14 = scalar_lea.sflag [#allocation3], 1
    %15 = vsyncpa %s14, 0
    %16 = vsyncpa [#allocation6], 0
    %s17 = scalar_lea.sflag [#allocation6], 1
    %18 = vsyncpa %s17, 0
    %19 = vsyncpa [#allocation4], 0
    %s20 = scalar_lea.sflag [#allocation4], 1
    %21 = vsyncpa %s20, 0
    %22 = vsyncpa [#allocation10], 0
    %s23 = scalar_lea.sflag [#allocation10], 1
    %24 = vsyncpa %s23, 0
    loop: start=0, step=1, limit=4
    $region2: #{tpu_custom_call.1} parent=1 // loop_pre_header
      _
    $region3: #{tpu_custom_call.1} parent=1 // loop_header
      %s26 = sphi 0, %s30
      %p27 = scmp.ge.s32.totalorder %s26, 4
      %s33 = sphi 0, %s45
      %s34 = sphi 0, %s41
      %s35 = sphi 0, %s33
      %s36 = sphi 0, %s34
      %s37 = sphi 0, %s35
      %s38 = sphi 0, %s36
      %s50 = sphi 0, %s52
      %s53 = sphi 0, %s50
      %s54 = sphi 0, %s53
      %s70 = sphi 0, %s54
      %s78 = sphi 0, %s80
      %s81 = sphi 0, %s78
      %s82 = sphi 0, %s81
      %s98 = sphi 0, %s82
      %s102 = sphi 0, %s102
      %s104 = sphi 0, %s102
      %s105 = sphi 0, %s104
      %s119 = sphi 0, %s105
      %s123 = sphi 0, %s123
      %s125 = sphi 0, %s123
      %s126 = sphi 0, %s125
      %s140 = sphi 0, %s126
      %s144 = sphi 0, %s144
      %s146 = sphi 0, %s144
      %s147 = sphi 0, %s146
      %s161 = sphi 0, %s147
      %s165 = sphi 0, %s165
      %s167 = sphi 0, %s165
      %s168 = sphi 0, %s167
      %s182 = sphi 0, %s168
      %s190 = sphi 0, %s192
      %s193 = sphi 0, %s190
      %s194 = sphi 0, %s193
      %s210 = sphi 0, %s194
      %s218 = sphi 0, %s220
      %s221 = sphi 0, %s218
      %s222 = sphi 0, %s221
      %s238 = sphi 0, %s222
    $region4: #{tpu_custom_call.1} parent=1 // loop_header_branch
      %29 = sbr.rel (%p27) target = $region8
    $region5: #{tpu_custom_call.1} parent=1 // loop_body
      %s31 = ssub.s32 %s26, 1
      %s32 = ssub.s32 %s26, 2
      %s39 = sadd.s32 1, %s34
      %p40 = scmp.ge.s32.totalorder %s39, 1
      %s41 = scalar_select %p40, 0, %s39
      %s42 = sadd.s32 1, %s33
      %s43 = scalar_select %p40, %s42, %s33
      %p44 = scmp.ge.s32.totalorder %s43, 2
      %s45 = scalar_select %p44, 0, %s43
      %s46 = ssub.s32 %s33, %s45
      %s47 = ssub.s32 %s34, %s41
      %s48 = sor.u32 %s46, %s47
      %p49 = scmp.eq.s32.totalorder %s48, 0
      %s51 = sadd.s32 %s50, 1
      %s52 = scalar_select %p49, %s50, %s51
      %p55 = pneg %p49
      %p56 = scmp.eq.s32.totalorder %s26, 1
      %p57 = por %p55, %p56
      %p58 = scmp.ne.s32.totalorder %s50, %s53
      %p59 = scmp.eq.s32.totalorder %s26, 0
      %p60 = por %p58, %p59
      %p61 = scmp.ne.s32.totalorder %s50, %s53
      %p62 = scmp.eq.s32.totalorder %s31, 1
      %p63 = por %p61, %p62
      %p64 = scmp.ne.s32.totalorder %s53, %s54
      %p65 = scmp.eq.s32.totalorder %s31, 0
      %p66 = por %p64, %p65
      %p67 = scmp.ne.s32.totalorder %s53, %s54
      %p68 = scmp.eq.s32.totalorder %s32, 1
      %p69 = por %p67, %p68
      %p71 = scmp.ne.s32.totalorder %s54, %s70
      %p72 = scmp.eq.s32.totalorder %s32, 0
      %p73 = por %p71, %p72
      %s74 = ssub.s32 %s33, %s45
      %s75 = ssub.s32 %s34, %s41
      %s76 = sor.u32 %s74, %s75
      %p77 = scmp.eq.s32.totalorder %s76, 0
      %s79 = sadd.s32 %s78, 1
      %s80 = scalar_select %p77, %s78, %s79
      %p83 = pneg %p77
      %p84 = scmp.eq.s32.totalorder %s26, 1
      %p85 = por %p83, %p84
      %p86 = scmp.ne.s32.totalorder %s78, %s81
      %p87 = scmp.eq.s32.totalorder %s26, 0
      %p88 = por %p86, %p87
      %p89 = scmp.ne.s32.totalorder %s78, %s81
      %p90 = scmp.eq.s32.totalorder %s31, 1
      %p91 = por %p89, %p90
      %p92 = scmp.ne.s32.totalorder %s81, %s82
      %p93 = scmp.eq.s32.totalorder %s31, 0
      %p94 = por %p92, %p93
      %p95 = scmp.ne.s32.totalorder %s81, %s82
      %p96 = scmp.eq.s32.totalorder %s32, 1
      %p97 = por %p95, %p96
      %p99 = scmp.ne.s32.totalorder %s82, %s98
      %p100 = scmp.eq.s32.totalorder %s32, 0
      %p101 = por %p99, %p100
      %s103 = sadd.s32 %s102, 1
      %p106 = scmp.eq.s32.totalorder %s26, 1
      %p107 = scmp.ne.s32.totalorder %s102, %s104
      %p108 = scmp.eq.s32.totalorder %s26, 0
      %p109 = por %p107, %p108
      %p110 = scmp.ne.s32.totalorder %s102, %s104
      %p111 = scmp.eq.s32.totalorder %s31, 1
      %p112 = por %p110, %p111
      %p113 = scmp.ne.s32.totalorder %s104, %s105
      %p114 = scmp.eq.s32.totalorder %s31, 0
      %p115 = por %p113, %p114
      %p116 = scmp.ne.s32.totalorder %s104, %s105
      %p117 = scmp.eq.s32.totalorder %s32, 1
      %p118 = por %p116, %p117
      %p120 = scmp.ne.s32.totalorder %s105, %s119
      %p121 = scmp.eq.s32.totalorder %s32, 0
      %p122 = por %p120, %p121
      %s124 = sadd.s32 %s123, 1
      %p127 = scmp.eq.s32.totalorder %s26, 1
      %p128 = scmp.ne.s32.totalorder %s123, %s125
      %p129 = scmp.eq.s32.totalorder %s26, 0
      %p130 = por %p128, %p129
      %p131 = scmp.ne.s32.totalorder %s123, %s125
      %p132 = scmp.eq.s32.totalorder %s31, 1
      %p133 = por %p131, %p132
      %p134 = scmp.ne.s32.totalorder %s125, %s126
      %p135 = scmp.eq.s32.totalorder %s31, 0
      %p136 = por %p134, %p135
      %p137 = scmp.ne.s32.totalorder %s125, %s126
      %p138 = scmp.eq.s32.totalorder %s32, 1
      %p139 = por %p137, %p138
      %p141 = scmp.ne.s32.totalorder %s126, %s140
      %p142 = scmp.eq.s32.totalorder %s32, 0
      %p143 = por %p141, %p142
      %s145 = sadd.s32 %s144, 1
      %p148 = scmp.eq.s32.totalorder %s26, 1
      %p149 = scmp.ne.s32.totalorder %s144, %s146
      %p150 = scmp.eq.s32.totalorder %s26, 0
      %p151 = por %p149, %p150
      %p152 = scmp.ne.s32.totalorder %s144, %s146
      %p153 = scmp.eq.s32.totalorder %s31, 1
      %p154 = por %p152, %p153
      %p155 = scmp.ne.s32.totalorder %s146, %s147
      %p156 = scmp.eq.s32.totalorder %s31, 0
      %p157 = por %p155, %p156
      %p158 = scmp.ne.s32.totalorder %s146, %s147
      %p159 = scmp.eq.s32.totalorder %s32, 1
      %p160 = por %p158, %p159
      %p162 = scmp.ne.s32.totalorder %s147, %s161
      %p163 = scmp.eq.s32.totalorder %s32, 0
      %p164 = por %p162, %p163
      %s166 = sadd.s32 %s165, 1
      %p169 = scmp.eq.s32.totalorder %s26, 1
      %p170 = scmp.ne.s32.totalorder %s165, %s167
      %p171 = scmp.eq.s32.totalorder %s26, 0
      %p172 = por %p170, %p171
      %p173 = scmp.ne.s32.totalorder %s165, %s167
      %p174 = scmp.eq.s32.totalorder %s31, 1
      %p175 = por %p173, %p174
      %p176 = scmp.ne.s32.totalorder %s167, %s168
      %p177 = scmp.eq.s32.totalorder %s31, 0
      %p178 = por %p176, %p177
      %p179 = scmp.ne.s32.totalorder %s167, %s168
      %p180 = scmp.eq.s32.totalorder %s32, 1
      %p181 = por %p179, %p180
      %p183 = scmp.ne.s32.totalorder %s168, %s182
      %p184 = scmp.eq.s32.totalorder %s32, 0
      %p185 = por %p183, %p184
      %s186 = ssub.s32 %s33, %s45
      %s187 = ssub.s32 %s34, %s41
      %s188 = sor.u32 %s186, %s187
      %p189 = scmp.eq.s32.totalorder %s188, 0
      %s191 = sadd.s32 %s190, 1
      %s192 = scalar_select %p189, %s190, %s191
      %p195 = pneg %p189
      %p196 = scmp.eq.s32.totalorder %s26, 1
      %p197 = por %p195, %p196
      %p198 = scmp.ne.s32.totalorder %s190, %s193
      %p199 = scmp.eq.s32.totalorder %s26, 0
      %p200 = por %p198, %p199
      %p201 = scmp.ne.s32.totalorder %s190, %s193
      %p202 = scmp.eq.s32.totalorder %s31, 1
      %p203 = por %p201, %p202
      %p204 = scmp.ne.s32.totalorder %s193, %s194
      %p205 = scmp.eq.s32.totalorder %s31, 0
      %p206 = por %p204, %p205
      %p207 = scmp.ne.s32.totalorder %s193, %s194
      %p208 = scmp.eq.s32.totalorder %s32, 1
      %p209 = por %p207, %p208
      %p211 = scmp.ne.s32.totalorder %s194, %s210
      %p212 = scmp.eq.s32.totalorder %s32, 0
      %p213 = por %p211, %p212
      %s214 = ssub.s32 %s33, %s45
      %s215 = ssub.s32 %s34, %s41
      %s216 = sor.u32 %s214, %s215
      %p217 = scmp.eq.s32.totalorder %s216, 0
      %s219 = sadd.s32 %s218, 1
      %s220 = scalar_select %p217, %s218, %s219
      %p223 = pneg %p217
      %p224 = scmp.eq.s32.totalorder %s26, 1
      %p225 = por %p223, %p224
      %p226 = scmp.ne.s32.totalorder %s218, %s221
      %p227 = scmp.eq.s32.totalorder %s26, 0
      %p228 = por %p226, %p227
      %p229 = scmp.ne.s32.totalorder %s218, %s221
      %p230 = scmp.eq.s32.totalorder %s31, 1
      %p231 = por %p229, %p230
      %p232 = scmp.ne.s32.totalorder %s221, %s222
      %p233 = scmp.eq.s32.totalorder %s31, 0
      %p234 = por %p232, %p233
      %p235 = scmp.ne.s32.totalorder %s221, %s222
      %p236 = scmp.eq.s32.totalorder %s32, 1
      %p237 = por %p235, %p236
      %p239 = scmp.ne.s32.totalorder %s222, %s238
      %p240 = scmp.eq.s32.totalorder %s32, 0
      %p241 = por %p239, %p240
      %p242 = scmp.le.s32.totalorder 1, %s26
      %p243 = scmp.lt.s32.totalorder %s26, 3
      %p244 = pnand %p242, %p243
      %p245 = pneg %p244
      // Predicated region
      $region9: #{tpu_custom_call.1} parent=5 // pred_check
        _
      $region10: #{tpu_custom_call.1} parent=5 // pred_check_branch
        %247 = sbr.rel (%p244) target = $region12
      $region11: #{tpu_custom_call.1} parent=5 // pred_region
        %s248 = ssub.s32 %s26, 1
        // Predicated region
        $region13: #{tpu_custom_call.1} parent=11 // pred_check
          %p249 = pneg %p115
        $region14: #{tpu_custom_call.1} parent=11 // pred_check_branch
          %251 = sbr.rel (%p249) target = $region16
        $region15: #{tpu_custom_call.1} parent=11 // pred_region
          _
        $region16: #{tpu_custom_call.1} parent=11 // pred_fallthru
          _
        // Predicated region
        $region17: #{tpu_custom_call.1} parent=11 // pred_check
          %p252 = pneg %p136
        $region18: #{tpu_custom_call.1} parent=11 // pred_check_branch
          %254 = sbr.rel (%p252) target = $region20
        $region19: #{tpu_custom_call.1} parent=11 // pred_region
          _
        $region20: #{tpu_custom_call.1} parent=11 // pred_fallthru
          _
        // Predicated region
        $region21: #{tpu_custom_call.1} parent=11 // pred_check
          %p255 = pneg %p157
        $region22: #{tpu_custom_call.1} parent=11 // pred_check_branch
          %257 = sbr.rel (%p255) target = $region24
        $region23: #{tpu_custom_call.1} parent=11 // pred_region
          %s259 = ssub.s32 2048, 2048
          %260 = vsyncadd [#allocation6], %s259
          %s261 = sshll.u32 [#allocation7], 4
          %s262 = int_to_ptr.vmem [resolvable:$true] %s261
          %267 = dma.hbm_to_vmem [thread:$0]  %s4, 2048, %s262, [#allocation6], 128, 128, 8
        $region24: #{tpu_custom_call.1} parent=11 // pred_fallthru
          _
        // Predicated region
        $region25: #{tpu_custom_call.1} parent=11 // pred_check
          %p268 = pneg %p178
        $region26: #{tpu_custom_call.1} parent=11 // pred_check_branch
          %270 = sbr.rel (%p268) target = $region28
        $region27: #{tpu_custom_call.1} parent=11 // pred_region
          _
        $region28: #{tpu_custom_call.1} parent=11 // pred_fallthru
          _
      $region12: #{tpu_custom_call.1} parent=5 // pred_fallthru
        _
      %p271 = scmp.lt.s32.totalorder %s26, 2
      // Predicated region
      $region29: #{tpu_custom_call.1} parent=5 // pred_check
        %p272 = pneg %p271
      $region30: #{tpu_custom_call.1} parent=5 // pred_check_branch
        %274 = sbr.rel (%p272) target = $region32
      $region31: #{tpu_custom_call.1} parent=5 // pred_region
        // Predicated region
        $region33: #{tpu_custom_call.1} parent=31 // pred_check
          %p275 = pneg %p60
        $region34: #{tpu_custom_call.1} parent=31 // pred_check_branch
          %277 = sbr.rel (%p275) target = $region36
        $region35: #{tpu_custom_call.1} parent=31 // pred_region
          %s278 = sand.u32 %s50, 1
          %s279 = scalar_lea.sflag [#allocation3], %s278
          %s280 = sand.u32 %s50, 1
          %s281 = smul.addr %s280, 64
          %s282 = scalar_lea.vmem [#allocation2], %s281
          %s283 = smul.u32 8, %s34
          %s285 = ssub.s32 1024, 1024
          %286 = vsyncadd %s279, %s285
          %s287 = smul.addr %s33, 8
          %s288 = sadd.s32 %s283, %s287
          %s289 = smul.addr %s288, 128
          %s290 = scalar_lea.hbm %s0, %s289
          %s291 = sshll.u32 %s282, 4
          %s292 = int_to_ptr.vmem [resolvable:$true] %s291
          %297 = dma.hbm_to_vmem [thread:$0]  %s290, 1024, %s292, %s279, 128, 128, 8
        $region36: #{tpu_custom_call.1} parent=31 // pred_fallthru
          _
        // Predicated region
        $region37: #{tpu_custom_call.1} parent=31 // pred_check
          %p298 = pneg %p88
        $region38: #{tpu_custom_call.1} parent=31 // pred_check_branch
          %300 = sbr.rel (%p298) target = $region40
        $region39: #{tpu_custom_call.1} parent=31 // pred_region
          %s301 = sand.u32 %s26, 1
          %s302 = scalar_lea.sflag [#allocation6], %s301
          %s303 = sand.u32 %s78, 1
          %s304 = smul.addr %s303, 64
          %s305 = scalar_lea.vmem [#allocation5], %s304
          %s306 = smul.u32 8, %s34
          %s308 = ssub.s32 1024, 1024
          %309 = vsyncadd %s302, %s308
          %s310 = smul.addr %s33, 8
          %s311 = sadd.s32 %s306, %s310
          %s312 = smul.addr %s311, 128
          %s313 = scalar_lea.hbm %s1, %s312
          %s314 = sshll.u32 %s305, 4
          %s315 = int_to_ptr.vmem [resolvable:$true] %s314
          %320 = dma.hbm_to_vmem [thread:$0]  %s313, 1024, %s315, %s302, 128, 128, 8
        $region40: #{tpu_custom_call.1} parent=31 // pred_fallthru
          _
      $region32: #{tpu_custom_call.1} parent=5 // pred_fallthru
        _
      %p321 = scmp.le.s32.totalorder 1, %s26
      %p322 = scmp.lt.s32.totalorder %s26, 3
      %p323 = pnand %p321, %p322
      %p324 = pneg %p323
      // Predicated region
      $region41: #{tpu_custom_call.1} parent=5 // pred_check
        _
      $region42: #{tpu_custom_call.1} parent=5 // pred_check_branch
        %326 = sbr.rel (%p323) target = $region44
      $region43: #{tpu_custom_call.1} parent=5 // pred_region
        %s327 = ssub.s32 %s26, 1
        %s328 = sand.u32 %s53, 1
        %s329 = scalar_lea.sflag [#allocation3], %s328
        %s330 = sand.u32 %s53, 1
        %s331 = smul.addr %s330, 64
        %s332 = scalar_lea.vmem [#allocation2], %s331
        // Predicated region
        $region45: #{tpu_custom_call.1} parent=43 // pred_check
          %p333 = pneg %p66
        $region46: #{tpu_custom_call.1} parent=43 // pred_check_branch
          %335 = sbr.rel (%p333) target = $region48
        $region47: #{tpu_custom_call.1} parent=43 // pred_region
          %336 = dma.done %s329, 1024
        $region48: #{tpu_custom_call.1} parent=43 // pred_fallthru
          _
        %s337 = sand.u32 %s31, 1
        %s338 = scalar_lea.sflag [#allocation6], %s337
        %s339 = sand.u32 %s81, 1
        %s340 = smul.addr %s339, 64
        %s341 = scalar_lea.vmem [#allocation5], %s340
        // Predicated region
        $region49: #{tpu_custom_call.1} parent=43 // pred_check
          %p342 = pneg %p94
        $region50: #{tpu_custom_call.1} parent=43 // pred_check_branch
          %344 = sbr.rel (%p342) target = $region52
        $region51: #{tpu_custom_call.1} parent=43 // pred_region
          %345 = dma.done %s338, 1024
        $region52: #{tpu_custom_call.1} parent=43 // pred_fallthru
          _
        // Predicated region
        $region53: #{tpu_custom_call.1} parent=43 // pred_check
          %p346 = pneg %p157
        $region54: #{tpu_custom_call.1} parent=43 // pred_check_branch
          %348 = sbr.rel (%p346) target = $region56
        $region55: #{tpu_custom_call.1} parent=43 // pred_region
          %349 = dma.done [#allocation6], 2048
        $region56: #{tpu_custom_call.1} parent=43 // pred_fallthru
          _
        %s350 = sand.u32 %s53, 1
        %s351 = scalar_lea.sflag [#allocation3], %s350
        %s352 = sand.u32 %s53, 1
        %s353 = smul.addr %s352, 64
        %s354 = scalar_lea.vmem [#allocation2], %s353
        %p355 = pneg %p66
        %p356 = pneg %p63
        %s357 = sand.u32 %s31, 1
        %s358 = scalar_lea.sflag [#allocation6], %s357
        %s359 = sand.u32 %s81, 1
        %s360 = smul.addr %s359, 64
        %s361 = scalar_lea.vmem [#allocation5], %s360
        %p362 = pneg %p94
        %p363 = pneg %p91
        %p364 = pneg %p115
        %p365 = pneg %p112
        %p366 = pneg %p136
        %p367 = pneg %p133
        %p368 = pneg %p157
        %p369 = pneg %p154
        %p370 = pneg %p178
        %p371 = pneg %p175
        %p372 = pneg %p206
        %p373 = pneg %p203
        %s374 = sand.u32 %s193, 1
        %s375 = scalar_lea.sflag [#allocation4], %s374
        %s376 = sand.u32 %s193, 1
        %s377 = smul.addr %s376, 64
        %s378 = scalar_lea.vmem [#allocation8], %s377
        %p379 = pneg %p234
        %p380 = pneg %p231
        %s381 = sand.u32 %s221, 1
        %s382 = scalar_lea.sflag [#allocation10], %s381
        %s383 = sand.u32 %s221, 1
        %s384 = smul.addr %s383, 64
        %s385 = scalar_lea.vmem [#allocation9], %s384
        %s386 = smul.u32 8, %s36
        %s387 = smul.u32 8, %s36
        %s388 = smul.u32 8, %s36
        %s389 = smul.u32 8, %s36
        %v390 = vld [vmem:[%s341] sm:$0xff]
        %v391 = vld [vmem:[%s341 + $0x8] sm:$0xff]
        %v392 = vld [vmem:[%s341 + $0x10] sm:$0xff]
        %v393 = vld [vmem:[%s341 + $0x18] sm:$0xff]
        %v394 = vld [vmem:[%s341 + $0x20] sm:$0xff]
        %v395 = vld [vmem:[%s341 + $0x28] sm:$0xff]
        %v396 = vld [vmem:[%s341 + $0x30] sm:$0xff]
        %v397 = vld [vmem:[%s341 + $0x38] sm:$0xff]
        %v398 = vld [vmem:[%s332] sm:$0xff]
        %v399 = vld [vmem:[%s332 + $0x8] sm:$0xff]
        %v400 = vld [vmem:[%s332 + $0x10] sm:$0xff]
        %v401 = vld [vmem:[%s332 + $0x18] sm:$0xff]
        %v402 = vld [vmem:[%s332 + $0x20] sm:$0xff]
        %v403 = vld [vmem:[%s332 + $0x28] sm:$0xff]
        %v404 = vld [vmem:[%s332 + $0x30] sm:$0xff]
        %v405 = vld [vmem:[%s332 + $0x38] sm:$0xff]
        %v406 = vadd.f32 %v390, %v398
        %v407 = vadd.f32 %v391, %v399
        %v408 = vadd.f32 %v392, %v400
        %v409 = vadd.f32 %v393, %v401
        %v410 = vadd.f32 %v394, %v402
        %v411 = vadd.f32 %v395, %v403
        %v412 = vadd.f32 %v396, %v404
        %v413 = vadd.f32 %v397, %v405
        %414 = vadd.xlane.f32.xlu0 %v406
        %v415 = vpop.xlane.xlu0 %414
        %416 = vadd.xlane.f32.xlu0 %v407
        %v417 = vpop.xlane.xlu0 %416
        %418 = vadd.xlane.f32.xlu0 %v408
        %v419 = vpop.xlane.xlu0 %418
        %420 = vadd.xlane.f32.xlu0 %v409
        %v421 = vpop.xlane.xlu0 %420
        %422 = vadd.xlane.f32.xlu0 %v410
        %v423 = vpop.xlane.xlu0 %422
        %424 = vadd.xlane.f32.xlu0 %v411
        %v425 = vpop.xlane.xlu0 %424
        %426 = vadd.xlane.f32.xlu0 %v412
        %v427 = vpop.xlane.xlu0 %426
        %428 = vadd.xlane.f32.xlu0 %v413
        %v429 = vpop.xlane.xlu0 %428
        %v430 = vrcp.pop 128.0
        %v431 = vmul.f32 %v415, %v430
        %v432 = vmul.f32 %v417, %v430
        %v433 = vmul.f32 %v419, %v430
        %v434 = vmul.f32 %v421, %v430
        %v435 = vmul.f32 %v423, %v430
        %v436 = vmul.f32 %v425, %v430
        %v437 = vmul.f32 %v427, %v430
        %v438 = vmul.f32 %v429, %v430
        %v439 = vmul.f32 %v406, %v406
        %v440 = vmul.f32 %v407, %v407
        %v441 = vmul.f32 %v408, %v408
        %v442 = vmul.f32 %v409, %v409
        %v443 = vmul.f32 %v410, %v410
        %v444 = vmul.f32 %v411, %v411
        %v445 = vmul.f32 %v412, %v412
        %v446 = vmul.f32 %v413, %v413
        %447 = vadd.xlane.f32.xlu0 %v439
        %v448 = vpop.xlane.xlu0 %447
        %449 = vadd.xlane.f32.xlu0 %v440
        %v450 = vpop.xlane.xlu0 %449
        %451 = vadd.xlane.f32.xlu0 %v441
        %v452 = vpop.xlane.xlu0 %451
        %453 = vadd.xlane.f32.xlu0 %v442
        %v454 = vpop.xlane.xlu0 %453
        %455 = vadd.xlane.f32.xlu0 %v443
        %v456 = vpop.xlane.xlu0 %455
        %457 = vadd.xlane.f32.xlu0 %v444
        %v458 = vpop.xlane.xlu0 %457
        %459 = vadd.xlane.f32.xlu0 %v445
        %v460 = vpop.xlane.xlu0 %459
        %461 = vadd.xlane.f32.xlu0 %v446
        %v462 = vpop.xlane.xlu0 %461
        %v463 = vmul.f32 %v448, %v430
        %v464 = vmul.f32 %v450, %v430
        %v465 = vmul.f32 %v452, %v430
        %v466 = vmul.f32 %v454, %v430
        %v467 = vmul.f32 %v456, %v430
        %v468 = vmul.f32 %v458, %v430
        %v469 = vmul.f32 %v460, %v430
        %v470 = vmul.f32 %v462, %v430
        %v471 = vmul.f32 %v431, %v431
        %v472 = vmul.f32 %v432, %v432
        %v473 = vmul.f32 %v433, %v433
        %v474 = vmul.f32 %v434, %v434
        %v475 = vmul.f32 %v435, %v435
        %v476 = vmul.f32 %v436, %v436
        %v477 = vmul.f32 %v437, %v437
        %v478 = vmul.f32 %v438, %v438
        %v479 = vsub.f32 %v463, %v471
        %v480 = vsub.f32 %v464, %v472
        %v481 = vsub.f32 %v465, %v473
        %v482 = vsub.f32 %v466, %v474
        %v483 = vsub.f32 %v467, %v475
        %v484 = vsub.f32 %v468, %v476
        %v485 = vsub.f32 %v469, %v477
        %v486 = vsub.f32 %v470, %v478
        %v487 = vmax.f32 %v479, 0.0
        %v488 = vmax.f32 %v480, 0.0
        %v489 = vmax.f32 %v481, 0.0
        %v490 = vmax.f32 %v482, 0.0
        %v491 = vmax.f32 %v483, 0.0
        %v492 = vmax.f32 %v484, 0.0
        %v493 = vmax.f32 %v485, 0.0
        %v494 = vmax.f32 %v486, 0.0
        %v495 = vsub.f32 %v406, %v431
        %v496 = vsub.f32 %v407, %v432
        %v497 = vsub.f32 %v408, %v433
        %v498 = vsub.f32 %v409, %v434
        %v499 = vsub.f32 %v410, %v435
        %v500 = vsub.f32 %v411, %v436
        %v501 = vsub.f32 %v412, %v437
        %v502 = vsub.f32 %v413, %v438
        %v503 = vadd.f32 %v487, 1e-05
        %v504 = vadd.f32 %v488, 1e-05
        %v505 = vadd.f32 %v489, 1e-05
        %v506 = vadd.f32 %v490, 1e-05
        %v507 = vadd.f32 %v491, 1e-05
        %v508 = vadd.f32 %v492, 1e-05
        %v509 = vadd.f32 %v493, 1e-05
        %v510 = vadd.f32 %v494, 1e-05
        %v511 = vrsqrt.pop %v503
        %v512 = vrsqrt.pop %v504
        %v513 = vrsqrt.pop %v505
        %v514 = vrsqrt.pop %v506
        %v515 = vrsqrt.pop %v507
        %v516 = vrsqrt.pop %v508
        %v517 = vrsqrt.pop %v509
        %v518 = vrsqrt.pop %v510
        %v519 = vmul.f32 %v495, %v511
        %v520 = vmul.f32 %v496, %v512
        %v521 = vmul.f32 %v497, %v513
        %v522 = vmul.f32 %v498, %v514
        %v523 = vmul.f32 %v499, %v515
        %v524 = vmul.f32 %v500, %v516
        %v525 = vmul.f32 %v501, %v517
        %v526 = vmul.f32 %v502, %v518
        %v527 = vld [vmem:[%s2] sm:$0x1]
        %v529 = vlaneseq
        %v530 = vshrl.u32 %v529, 7
        %v531 = vsub.s32 0, %v530
        %v532 = vrot.slane %v527, %v531
        %v534 = vmul.f32 %v519, %v532
        %v535 = vmul.f32 %v520, %v532
        %v536 = vmul.f32 %v521, %v532
        %v537 = vmul.f32 %v522, %v532
        %v538 = vmul.f32 %v523, %v532
        %v539 = vmul.f32 %v524, %v532
        %v540 = vmul.f32 %v525, %v532
        %v541 = vmul.f32 %v526, %v532
        %v542 = vld [vmem:[%s3] sm:$0x1]
        %v544 = vlaneseq
        %v545 = vshrl.u32 %v544, 7
        %v546 = vsub.s32 0, %v545
        %v547 = vrot.slane %v542, %v546
        %v549 = vadd.f32 %v534, %v547
        %v550 = vadd.f32 %v535, %v547
        %v551 = vadd.f32 %v536, %v547
        %v552 = vadd.f32 %v537, %v547
        %v553 = vadd.f32 %v538, %v547
        %v554 = vadd.f32 %v539, %v547
        %v555 = vadd.f32 %v540, %v547
        %v556 = vadd.f32 %v541, %v547
        %v557 = vld [vmem:[#allocation7] sm:$0xff]
        %v558 = vld [vmem:[#allocation7 + $0x8] sm:$0xff]
        %v559 = vld [vmem:[#allocation7 + $0x10] sm:$0xff]
        %v560 = vld [vmem:[#allocation7 + $0x18] sm:$0xff]
        %v561 = vld [vmem:[#allocation7 + $0x20] sm:$0xff]
        %v562 = vld [vmem:[#allocation7 + $0x28] sm:$0xff]
        %v563 = vld [vmem:[#allocation7 + $0x30] sm:$0xff]
        %v564 = vld [vmem:[#allocation7 + $0x38] sm:$0xff]
        %v565 = vld [vmem:[#allocation7 + $0x40] sm:$0xff]
        %v566 = vld [vmem:[#allocation7 + $0x48] sm:$0xff]
        %v567 = vld [vmem:[#allocation7 + $0x50] sm:$0xff]
        %v568 = vld [vmem:[#allocation7 + $0x58] sm:$0xff]
        %v569 = vld [vmem:[#allocation7 + $0x60] sm:$0xff]
        %v570 = vld [vmem:[#allocation7 + $0x68] sm:$0xff]
        %v571 = vld [vmem:[#allocation7 + $0x70] sm:$0xff]
        %v572 = vld [vmem:[#allocation7 + $0x78] sm:$0xff]
        %v573 = vld [vmem:[%s5] sm:$0x1]
        %v575 = vlaneseq
        %v576 = vshrl.u32 %v575, 7
        %v577 = vsub.s32 0, %v576
        %v578 = vrot.slane %v573, %v577
        %580 = vmatprep.subr.mxu0 0.0
        %581 = vmatpush1.msra.mxu0 %v557
        %582 = vmatprep.subr.mxu0 0.0
        %583 = vmatpush1.msra.mxu0 %v558
        %584 = vmatprep.subr.mxu0 0.0
        %585 = vmatpush1.msra.mxu0 %v559
        %586 = vmatprep.subr.mxu0 0.0
        %587 = vmatpush1.msra.mxu0 %v560
        %588 = vmatprep.subr.mxu0 0.0
        %589 = vmatpush1.msra.mxu0 %v561
        %590 = vmatprep.subr.mxu0 0.0
        %591 = vmatpush1.msra.mxu0 %v562
        %592 = vmatprep.subr.mxu0 0.0
        %593 = vmatpush1.msra.mxu0 %v563
        %594 = vmatprep.subr.mxu0 0.0
        %595 = vmatpush1.msra.mxu0 %v564
        %596 = vmatprep.subr.mxu0 0.0
        %597 = vmatpush1.msra.mxu0 %v565
        %598 = vmatprep.subr.mxu0 0.0
        %599 = vmatpush1.msra.mxu0 %v566
        %600 = vmatprep.subr.mxu0 0.0
        %601 = vmatpush1.msra.mxu0 %v567
        %602 = vmatprep.subr.mxu0 0.0
        %603 = vmatpush1.msra.mxu0 %v568
        %604 = vmatprep.subr.mxu0 0.0
        %605 = vmatpush1.msra.mxu0 %v569
        %606 = vmatprep.subr.mxu0 0.0
        %607 = vmatpush1.msra.mxu0 %v570
        %608 = vmatprep.subr.mxu0 0.0
        %609 = vmatpush1.msra.mxu0 %v571
        %610 = vmatprep.subr.mxu0 0.0
        %611 = vmatpush1.msra.mxu0 %v572
        %612 = vmatprep.subr.mxu0 0.0
        %613 = vmatpush1.msra.mxu0 0.0
        %614 = vmatprep.subr.mxu0 0.0
        %615 = vmatpush1.msra.mxu0 0.0
        %616 = vmatprep.subr.mxu0 0.0
        %617 = vmatpush1.msra.mxu0 0.0
        %618 = vmatprep.subr.mxu0 0.0
        %619 = vmatpush1.msra.mxu0 0.0
        %620 = vmatprep.subr.mxu0 0.0
        %621 = vmatpush1.msra.mxu0 0.0
        %622 = vmatprep.subr.mxu0 0.0
        %623 = vmatpush1.msra.mxu0 0.0
        %624 = vmatprep.subr.mxu0 0.0
        %625 = vmatpush1.msra.mxu0 0.0
        %626 = vmatprep.subr.mxu0 0.0
        %627 = vmatpush1.msra.mxu0 0.0
        %628 = vmatprep.subr.mxu0 0.0
        %629 = vmatpush1.msra.mxu0 0.0
        %630 = vmatprep.subr.mxu0 0.0
        %631 = vmatpush1.msra.mxu0 0.0
        %632 = vmatprep.subr.mxu0 0.0
        %633 = vmatpush1.msra.mxu0 0.0
        %634 = vmatprep.subr.mxu0 0.0
        %635 = vmatpush1.msra.mxu0 0.0
        %636 = vmatprep.subr.mxu0 0.0
        %637 = vmatpush1.msra.mxu0 0.0
        %638 = vmatprep.subr.mxu0 0.0
        %639 = vmatpush1.msra.mxu0 0.0
        %640 = vmatprep.subr.mxu0 0.0
        %641 = vmatpush1.msra.mxu0 0.0
        %642 = vmatprep.subr.mxu0 0.0
        %643 = vmatpush1.msra.mxu0 0.0
        %644 = vmatprep.mubr.f32.mxu0 0.0
        %645 = vmatmul.mubr.f32.gmra.mrb[0].mxu0 %v549
        %v646 = vpop.f32.mrb[0].mxu0
        %v647 = vadd.f32 %v578, %v646
        %v648 = vpop.f32.mrb[0].mxu0
        %649 = vmatprep.mubr.f32.mxu0 0.0
        %650 = vmatmul.mubr.f32.gmra.mrb[0].mxu0 %v550
        %v651 = vpop.f32.mrb[0].mxu0
        %v652 = vadd.f32 %v578, %v651
        %v653 = vpop.f32.mrb[0].mxu0
        %654 = vmatprep.mubr.f32.mxu0 0.0
        %655 = vmatmul.mubr.f32.gmra.mrb[0].mxu0 %v551
        %v656 = vpop.f32.mrb[0].mxu0
        %v657 = vadd.f32 %v578, %v656
        %v658 = vpop.f32.mrb[0].mxu0
        %659 = vmatprep.mubr.f32.mxu0 0.0
        %660 = vmatmul.mubr.f32.gmra.mrb[0].mxu0 %v552
        %v661 = vpop.f32.mrb[0].mxu0
        %v662 = vadd.f32 %v578, %v661
        %v663 = vpop.f32.mrb[0].mxu0
        %664 = vmatprep.mubr.f32.mxu0 0.0
        %665 = vmatmul.mubr.f32.gmra.mrb[0].mxu0 %v553
        %v666 = vpop.f32.mrb[0].mxu0
        %v667 = vadd.f32 %v578, %v666
        %v668 = vpop.f32.mrb[0].mxu0
        %669 = vmatprep.mubr.f32.mxu0 0.0
        %670 = vmatmul.mubr.f32.gmra.mrb[0].mxu0 %v554
        %v671 = vpop.f32.mrb[0].mxu0
        %v672 = vadd.f32 %v578, %v671
        %v673 = vpop.f32.mrb[0].mxu0
        %674 = vmatprep.mubr.f32.mxu0 0.0
        %675 = vmatmul.mubr.f32.gmra.mrb[0].mxu0 %v555
        %v676 = vpop.f32.mrb[0].mxu0
        %v677 = vadd.f32 %v578, %v676
        %v678 = vpop.f32.mrb[0].mxu0
        %679 = vmatprep.mubr.f32.mxu0 0.0
        %680 = vmatmul.mubr.f32.gmra.mrb[0].mxu0 %v556
        %v681 = vpop.f32.mrb[0].mxu0
        %v682 = vadd.f32 %v578, %v681
        %v683 = vpop.f32.mrb[0].mxu0
        %684 = vdwg.mxu0
        %685 = vst [vmem:[%s378] sm:$0xff] %v647
        %686 = vst [vmem:[%s378 + $0x8] sm:$0xff] %v652
        %687 = vst [vmem:[%s378 + $0x10] sm:$0xff] %v657
        %688 = vst [vmem:[%s378 + $0x18] sm:$0xff] %v662
        %689 = vst [vmem:[%s378 + $0x20] sm:$0xff] %v667
        %690 = vst [vmem:[%s378 + $0x28] sm:$0xff] %v672
        %691 = vst [vmem:[%s378 + $0x30] sm:$0xff] %v677
        %692 = vst [vmem:[%s378 + $0x38] sm:$0xff] %v682
        %693 = vst [vmem:[%s385] sm:$0xff] %v406
        %694 = vst [vmem:[%s385 + $0x8] sm:$0xff] %v407
        %695 = vst [vmem:[%s385 + $0x10] sm:$0xff] %v408
        %696 = vst [vmem:[%s385 + $0x18] sm:$0xff] %v409
        %697 = vst [vmem:[%s385 + $0x20] sm:$0xff] %v410
        %698 = vst [vmem:[%s385 + $0x28] sm:$0xff] %v411
        %699 = vst [vmem:[%s385 + $0x30] sm:$0xff] %v412
        %700 = vst [vmem:[%s385 + $0x38] sm:$0xff] %v413
        %s701 = sand.u32 %s193, 1
        %s702 = scalar_lea.sflag [#allocation4], %s701
        %s703 = sand.u32 %s193, 1
        %s704 = smul.addr %s703, 64
        %s705 = scalar_lea.vmem [#allocation8], %s704
        %s706 = sand.u32 %s221, 1
        %s707 = scalar_lea.sflag [#allocation10], %s706
        %s708 = sand.u32 %s221, 1
        %s709 = smul.addr %s708, 64
        %s710 = scalar_lea.vmem [#allocation9], %s709
        // Predicated region
        $region57: #{tpu_custom_call.1} parent=43 // pred_check
          %p711 = pneg %p203
        $region58: #{tpu_custom_call.1} parent=43 // pred_check_branch
          %713 = sbr.rel (%p711) target = $region60
        $region59: #{tpu_custom_call.1} parent=43 // pred_region
          %s714 = smul.u32 8, %s36
          %s716 = ssub.s32 1024, 1024
          %717 = vsyncadd %s702, %s716
          %s718 = smul.addr %s35, 8
          %s719 = sadd.s32 %s714, %s718
          %s720 = smul.addr %s719, 128
          %s721 = scalar_lea.hbm %s6, %s720
          %s722 = sshll.u32 %s705, 4
          %s723 = int_to_ptr.vmem [resolvable:$true] %s722
          %728 = dma.vmem_to_hbm [thread:$0]  %s723, 1024, %s721, %s702, 128, 128, 8
        $region60: #{tpu_custom_call.1} parent=43 // pred_fallthru
          _
        // Predicated region
        $region61: #{tpu_custom_call.1} parent=43 // pred_check
          %p729 = pneg %p231
        $region62: #{tpu_custom_call.1} parent=43 // pred_check_branch
          %731 = sbr.rel (%p729) target = $region64
        $region63: #{tpu_custom_call.1} parent=43 // pred_region
          %s732 = smul.u32 8, %s36
          %s734 = ssub.s32 1024, 1024
          %735 = vsyncadd %s707, %s734
          %s736 = smul.addr %s35, 8
          %s737 = sadd.s32 %s732, %s736
          %s738 = smul.addr %s737, 128
          %s739 = scalar_lea.hbm %s7, %s738
          %s740 = sshll.u32 %s710, 4
          %s741 = int_to_ptr.vmem [resolvable:$true] %s740
          %746 = dma.vmem_to_hbm [thread:$0]  %s741, 1024, %s739, %s707, 128, 128, 8
        $region64: #{tpu_custom_call.1} parent=43 // pred_fallthru
          _
      $region44: #{tpu_custom_call.1} parent=5 // pred_fallthru
        _
      %p747 = scmp.le.s32.totalorder 2, %s26
      // Predicated region
      $region65: #{tpu_custom_call.1} parent=5 // pred_check
        %p748 = pneg %p747
      $region66: #{tpu_custom_call.1} parent=5 // pred_check_branch
        %750 = sbr.rel (%p748) target = $region68
      $region67: #{tpu_custom_call.1} parent=5 // pred_region
        %s751 = ssub.s32 %s26, 2
        // Predicated region
        $region69: #{tpu_custom_call.1} parent=67 // pred_check
          %p752 = pneg %p209
        $region70: #{tpu_custom_call.1} parent=67 // pred_check_branch
          %754 = sbr.rel (%p752) target = $region72
        $region71: #{tpu_custom_call.1} parent=67 // pred_region
          %s755 = sand.u32 %s194, 1
          %s756 = scalar_lea.sflag [#allocation4], %s755
          %s757 = sand.u32 %s194, 1
          %s758 = smul.addr %s757, 64
          %s759 = scalar_lea.vmem [#allocation8], %s758
          %760 = dma.done %s756, 1024
        $region72: #{tpu_custom_call.1} parent=67 // pred_fallthru
          _
        // Predicated region
        $region73: #{tpu_custom_call.1} parent=67 // pred_check
          %p761 = pneg %p237
        $region74: #{tpu_custom_call.1} parent=67 // pred_check_branch
          %763 = sbr.rel (%p761) target = $region76
        $region75: #{tpu_custom_call.1} parent=67 // pred_region
          %s764 = sand.u32 %s222, 1
          %s765 = scalar_lea.sflag [#allocation10], %s764
          %s766 = sand.u32 %s222, 1
          %s767 = smul.addr %s766, 64
          %s768 = scalar_lea.vmem [#allocation9], %s767
          %769 = dma.done %s765, 1024
        $region76: #{tpu_custom_call.1} parent=67 // pred_fallthru
          _
      $region68: #{tpu_custom_call.1} parent=5 // pred_fallthru
        _
    $region6: #{tpu_custom_call.1} parent=1 // loop_footer
      %s30 = sadd.s32 1, %s26
    $region7: #{tpu_custom_call.1} parent=1 // loop_footer_branch
      %25 = sbr.rel target = $region3
    $region8: #{tpu_custom_call.1} parent=1 // loop_exit
      _
    %770 = vsyncpa [#allocation3], 1
    %s771 = scalar_lea.sflag [#allocation3], 1
    %772 = vsyncpa %s771, 1
    %773 = vsyncpa [#allocation6], 1
    %s774 = scalar_lea.sflag [#allocation6], 1
    %775 = vsyncpa %s774, 1
    %776 = vsyncpa [#allocation4], 1
    %s777 = scalar_lea.sflag [#allocation4], 1
    %778 = vsyncpa %s777, 1
    %779 = vsyncpa [#allocation10], 1
    %s780 = scalar_lea.sflag [#allocation10], 1
    %781 = vsyncpa %s780, 1

</llo_original>
